<compile_context>
chip_gen: v5e
topology: v5e:2x2
jax: 0.10.0
libtpu: 0.0.40
codegen_flags: <defaults>
</compile_context>

<pallas_src>
import jax
import jax.numpy as jnp
from jax.experimental import pallas as pl
from jax.experimental.pallas import tpu as pltpu


def adjust_kernel(x_ref, w_ref, bias_ref, o_ref):
    # x_ref:    (C_in, HW)    bf16 — one image, channels-major, spatial in lanes
    # w_ref:    (C_out, C_in) bf16 — 1x1 conv weight with BN scale folded in
    # bias_ref: (C_out, 1)    f32  — folded BN bias (beta - mean * scale)
    # o_ref:    (C_out, HW)   f32  — lane-dense output
    y = jnp.dot(w_ref[...], x_ref[...], preferred_element_type=jnp.float32)
    o_ref[...] = y + bias_ref[...]


def adjust_forward(x, conv_w, gamma, beta, running_mean, running_var,
                   center_size=7, eps=1e-5):
    """x: (N, C_in, H, W) float32 (NCHW, like PyTorch). Returns NCHW output."""
    N, C_in, H, W = x.shape
    C_out = conv_w.shape[0]
    HW = H * W

    # Fold BatchNorm (inference mode) into the conv weight and a per-channel bias.
    scale = gamma / jnp.sqrt(running_var + eps)                  # (C_out,)
    bias = beta - running_mean * scale                           # (C_out,)
    w_mat = conv_w.reshape(C_out, C_in) * scale[:, None]         # (C_out, C_in), scale folded

    # NCHW flattened per image is already (C_in, H*W): pure reshape, no transpose.
    x3 = x.reshape(N, C_in, HW)

    # bf16 operands for the matmul; f32 accumulation inside the kernel.
    x_bf16 = x3.astype(jnp.bfloat16)
    w_bf16 = w_mat.astype(jnp.bfloat16)
    bias2 = bias.reshape(C_out, 1).astype(jnp.float32)

    out = pl.pallas_call(
        adjust_kernel,
        out_shape=jax.ShapeDtypeStruct((N, C_out, HW), jnp.float32),
        grid_spec=pltpu.PrefetchScalarGridSpec(
            num_scalar_prefetch=0,
            grid=(N,),                                  # one grid step per image
            in_specs=[
                pl.BlockSpec((None, C_in, HW), lambda n: (n, 0, 0)),
                pl.BlockSpec((C_out, C_in), lambda n: (0, 0)),
                pl.BlockSpec((C_out, 1), lambda n: (0, 0)),
            ],
            out_specs=pl.BlockSpec((None, C_out, HW), lambda n: (n, 0, 0)),
        ),
        compiler_params=pltpu.CompilerParams(
            dimension_semantics=("parallel",)),         # 2 independent steps (megacore-friendly)
    )(x_bf16, w_bf16, bias2)

    # (N, C_out, HW) -> NCHW, no transpose needed.
    y = out.reshape(N, C_out, H, W)

    # Center crop (static shape check, same as PyTorch `x.size(3) < 20`).
    # Crop kept after the conv: computing the full (lane-dense) HW keeps stores
    # unmasked, which wins at these tiny sizes.
    if W < 20:
        l = (W - center_size) // 2
        r = l + center_size
        y = y[:, :, l:r, l:r]
    return y


if __name__ == "__main__":
    # Small shapes consistent with the module.
    N, C_in, H, W = 2, 8, 16, 16
    C_out = 16
    center_size = 7

    key = jax.random.PRNGKey(0)
    kx, kw, kg, kb, km, kv = jax.random.split(key, 6)

    x = jax.random.normal(kx, (N, C_in, H, W), dtype=jnp.float32)

    # Deterministic parameter init (synthetic, not a checkpoint load).
    conv_w = jax.random.normal(kw, (C_out, C_in, 1, 1), dtype=jnp.float32) * 0.1
    gamma = 1.0 + 0.1 * jax.random.normal(kg, (C_out,), dtype=jnp.float32)
    beta = 0.1 * jax.random.normal(kb, (C_out,), dtype=jnp.float32)
    running_mean = 0.05 * jax.random.normal(km, (C_out,), dtype=jnp.float32)
    running_var = jnp.abs(1.0 + 0.1 * jax.random.normal(kv, (C_out,), dtype=jnp.float32))

    out = adjust_forward(x, conv_w, gamma, beta, running_mean, running_var,
                         center_size=center_size)
    jax.block_until_ready(out)

    # Sanity-check against a pure-JAX f32 reference of the module math
    # (conv1x1 -> BN(inference) -> center crop). Tolerance widened to
    # bf16-appropriate levels since kernel inputs are cast to bf16.
    eps = 1e-5
    scale = gamma / jnp.sqrt(running_var + eps)
    bias = beta - running_mean * scale
    ref = jnp.einsum('nihw,oi->nohw', x, conv_w.reshape(C_out, C_in))
    ref = ref * scale[None, :, None, None] + bias[None, :, None, None]
    l = (W - center_size) // 2
    ref = ref[:, :, l:l + center_size, l:l + center_size]

    assert out.shape == (N, C_out, center_size, center_size)
    assert jnp.allclose(out, ref, atol=3e-2, rtol=3e-2)

    print("KERNEL_OK")
</pallas_src>

<mosaic_0001>
module attributes {stable_mosaic.version = 11 : i64} {
  func.func @adjust_kernel(%arg0: i32, %arg1: memref<1x8x256xbf16, #tpu.memory_space<vmem>>, %arg2: memref<16x8xbf16, #tpu.memory_space<vmem>>, %arg3: memref<16x1xf32, #tpu.memory_space<vmem>>, %arg4: memref<1x16x256xf32, #tpu.memory_space<vmem>>) attributes {dimension_semantics = [#tpu.dimension_semantics<parallel>], iteration_bounds = array<i64: 2>, scalar_prefetch = 0 : i64, scratch_operands = 0 : i64, tpu.core_type = #tpu.core_type<tc>, window_params = [{transform_indices = @transform_0, window_bounds = array<i64: 1, 8, 256>}, {pipeline_mode = #tpu.pipeline_mode<synchronous>, transform_indices = @transform_1, window_bounds = array<i64: 16, 8>}, {pipeline_mode = #tpu.pipeline_mode<synchronous>, transform_indices = @transform_2, window_bounds = array<i64: 16, 1>}, {transform_indices = @transform_3, window_bounds = array<i64: 1, 16, 256>}]} {
    %c0 = arith.constant 0 : index
    %c0_0 = arith.constant 0 : index
    %0 = vector.load %arg2[%c0, %c0_0] : memref<16x8xbf16, #tpu.memory_space<vmem>>, vector<16x8xbf16>
    %c0_1 = arith.constant 0 : index
    %c0_2 = arith.constant 0 : index
    %c0_3 = arith.constant 0 : index
    %1 = vector.load %arg1[%c0_1, %c0_2, %c0_3] : memref<1x8x256xbf16, #tpu.memory_space<vmem>>, vector<1x8x256xbf16>
    %2 = vector.shape_cast %1 : vector<1x8x256xbf16> to vector<8x256xbf16>
    %cst = arith.constant dense<0.000000e+00> : vector<16x256xf32>
    %3 = tpu.matmul %0, %2, %cst {dimension_numbers = #tpu.dot_dimension_numbers<[1], [0], [0], [1], [0, 0, 1, 1], [], []>} : vector<16x8xbf16>, vector<8x256xbf16>, vector<16x256xf32> -> vector<16x256xf32>
    %c0_4 = arith.constant 0 : index
    %c0_5 = arith.constant 0 : index
    %4 = vector.load %arg3[%c0_4, %c0_5] : memref<16x1xf32, #tpu.memory_space<vmem>>, vector<16x1xf32>
    %5 = vector.broadcast %4 : vector<16x1xf32> to vector<16x256xf32>
    %6 = arith.addf %3, %5 : vector<16x256xf32>
    %c0_6 = arith.constant 0 : index
    %c0_7 = arith.constant 0 : index
    %c0_8 = arith.constant 0 : index
    %7 = vector.load %arg4[%c0_6, %c0_7, %c0_8] : memref<1x16x256xf32, #tpu.memory_space<vmem>>, vector<1x16x256xf32>
    %8 = vector.shape_cast %7 : vector<1x16x256xf32> to vector<16x256xf32>
    %9 = vector.shape_cast %6 : vector<16x256xf32> to vector<1x16x256xf32>
    tpu.vector_store %arg4[%c0_6, %c0_7, %c0_8], %9 {strides = array<i32>} : memref<1x16x256xf32, #tpu.memory_space<vmem>>, vector<1x16x256xf32>,
    return
  }
  func.func @transform_0(%arg0: i32) -> (i32, i32, i32) {
    %c0_i32 = arith.constant 0 : i32
    %c0_i32_0 = arith.constant 0 : i32
    %c0_i32_1 = arith.constant 0 : i32
    return %arg0, %c0_i32, %c0_i32_0 : i32, i32, i32
  }
  func.func @transform_1(%arg0: i32) -> (i32, i32) {
    %c0_i32 = arith.constant 0 : i32
    %c0_i32_0 = arith.constant 0 : i32
    %c0_i32_1 = arith.constant 0 : i32
    return %c0_i32, %c0_i32_0 : i32, i32
  }
  func.func @transform_2(%arg0: i32) -> (i32, i32) {
    %c0_i32 = arith.constant 0 : i32
    %c0_i32_0 = arith.constant 0 : i32
    %c0_i32_1 = arith.constant 0 : i32
    return %c0_i32, %c0_i32_0 : i32, i32
  }
  func.func @transform_3(%arg0: i32) -> (i32, i32, i32) {
    %c0_i32 = arith.constant 0 : i32
    %c0_i32_0 = arith.constant 0 : i32
    %c0_i32_1 = arith.constant 0 : i32
    return %arg0, %c0_i32, %c0_i32_0 : i32, i32, i32
  }
}

</mosaic_0001>

<llo_original>
// kernel: tpu_custom_call.1
$region0: #{tpu_custom_call.1}
  #allocation0 [shape = 'u32[]', space=smem, size = 0x4, offset = 0x4, fixed_abs, tag = 'smem constant byte address 0x4 - core index']
  #allocation1 [shape = 'u32[72,128]{1,0:T(1,128)}', space=vmem, size = 0x9000, scoped, tag = 'internal scratch']
  %s0 = inlined_call_operand.vmem [shape: bf16[2,8,256], index: 0, kind: input, shape index: {}]
  %s1 = inlined_call_operand.vmem [shape: bf16[16,8], index: 1, kind: input, shape index: {}]
  %s2 = inlined_call_operand.vmem [shape: f32[16,1], index: 2, kind: input, shape index: {}]
  %s3 = inlined_call_operand.hbm [shape: f32[2,16,256], index: 3, kind: output, shape index: {}]
  %s4 = sld [smem:[#allocation0]]
  $region45: #{tpu_custom_call.1} parent=0
    _
  %s6 = ssub.s32 1, %s4
  %s7 = scalar_select 0, %s6, %s4
  $region1: #{tpu_custom_call.1} parent=0
    #allocation2 [shape = 'u8[32768]{0}', space=vmem, size = 0x8000, scoped, tag = 'output window, operand 0']
    #allocation3 [shape = 's32[2]{0}', space=sflag, size = 0x8, scoped, tag = 'scoped memory for tpu_custom_call.1']
    %8 = vsyncpa [#allocation3], 0
    %s9 = scalar_lea.sflag [#allocation3], 1
    %10 = vsyncpa %s9, 0
    loop: start=0, step=1, limit=4
    $region2: #{tpu_custom_call.1} parent=1 // loop_pre_header
      _
    $region3: #{tpu_custom_call.1} parent=1 // loop_header
      %s12 = sphi 0, %s16
      %p13 = scmp.ge.s32.totalorder %s12, 4
      %s22 = sphi 0, %s24
      %s25 = sphi 0, %s22
      %s26 = sphi 0, %s25
      %s42 = sphi 0, %s26
      %s46 = sphi 0, %s46
      %s48 = sphi 0, %s46
      %s49 = sphi 0, %s48
      %s63 = sphi 0, %s49
      %s67 = sphi 0, %s67
      %s69 = sphi 0, %s67
      %s70 = sphi 0, %s69
      %s84 = sphi 0, %s70
      %s90 = sphi 0, %s92
      %s93 = sphi 0, %s90
      %s94 = sphi 0, %s93
      %s110 = sphi 0, %s94
    $region4: #{tpu_custom_call.1} parent=1 // loop_header_branch
      %15 = sbr.rel (%p13) target = $region8
    $region5: #{tpu_custom_call.1} parent=1 // loop_body
      %s17 = ssub.s32 %s12, 1
      %s18 = ssub.s32 %s12, 2
      %s19 = sadd.s32 %s12, 1
      %s20 = ssub.s32 %s12, %s19
      %p21 = scmp.eq.s32.totalorder %s20, 0
      %s23 = sadd.s32 %s22, 1
      %s24 = scalar_select %p21, %s22, %s23
      %p27 = pneg %p21
      %p28 = scmp.eq.s32.totalorder %s12, 1
      %p29 = por %p27, %p28
      %p30 = scmp.ne.s32.totalorder %s22, %s25
      %p31 = scmp.eq.s32.totalorder %s12, 0
      %p32 = por %p30, %p31
      %p33 = scmp.ne.s32.totalorder %s22, %s25
      %p34 = scmp.eq.s32.totalorder %s17, 1
      %p35 = por %p33, %p34
      %p36 = scmp.ne.s32.totalorder %s25, %s26
      %p37 = scmp.eq.s32.totalorder %s17, 0
      %p38 = por %p36, %p37
      %p39 = scmp.ne.s32.totalorder %s25, %s26
      %p40 = scmp.eq.s32.totalorder %s18, 1
      %p41 = por %p39, %p40
      %p43 = scmp.ne.s32.totalorder %s26, %s42
      %p44 = scmp.eq.s32.totalorder %s18, 0
      %p45 = por %p43, %p44
      %s47 = sadd.s32 %s46, 1
      %p50 = scmp.eq.s32.totalorder %s12, 1
      %p51 = scmp.ne.s32.totalorder %s46, %s48
      %p52 = scmp.eq.s32.totalorder %s12, 0
      %p53 = por %p51, %p52
      %p54 = scmp.ne.s32.totalorder %s46, %s48
      %p55 = scmp.eq.s32.totalorder %s17, 1
      %p56 = por %p54, %p55
      %p57 = scmp.ne.s32.totalorder %s48, %s49
      %p58 = scmp.eq.s32.totalorder %s17, 0
      %p59 = por %p57, %p58
      %p60 = scmp.ne.s32.totalorder %s48, %s49
      %p61 = scmp.eq.s32.totalorder %s18, 1
      %p62 = por %p60, %p61
      %p64 = scmp.ne.s32.totalorder %s49, %s63
      %p65 = scmp.eq.s32.totalorder %s18, 0
      %p66 = por %p64, %p65
      %s68 = sadd.s32 %s67, 1
      %p71 = scmp.eq.s32.totalorder %s12, 1
      %p72 = scmp.ne.s32.totalorder %s67, %s69
      %p73 = scmp.eq.s32.totalorder %s12, 0
      %p74 = por %p72, %p73
      %p75 = scmp.ne.s32.totalorder %s67, %s69
      %p76 = scmp.eq.s32.totalorder %s17, 1
      %p77 = por %p75, %p76
      %p78 = scmp.ne.s32.totalorder %s69, %s70
      %p79 = scmp.eq.s32.totalorder %s17, 0
      %p80 = por %p78, %p79
      %p81 = scmp.ne.s32.totalorder %s69, %s70
      %p82 = scmp.eq.s32.totalorder %s18, 1
      %p83 = por %p81, %p82
      %p85 = scmp.ne.s32.totalorder %s70, %s84
      %p86 = scmp.eq.s32.totalorder %s18, 0
      %p87 = por %p85, %p86
      %s88 = ssub.s32 %s12, %s19
      %p89 = scmp.eq.s32.totalorder %s88, 0
      %s91 = sadd.s32 %s90, 1
      %s92 = scalar_select %p89, %s90, %s91
      %p95 = pneg %p89
      %p96 = scmp.eq.s32.totalorder %s12, 1
      %p97 = por %p95, %p96
      %p98 = scmp.ne.s32.totalorder %s90, %s93
      %p99 = scmp.eq.s32.totalorder %s12, 0
      %p100 = por %p98, %p99
      %p101 = scmp.ne.s32.totalorder %s90, %s93
      %p102 = scmp.eq.s32.totalorder %s17, 1
      %p103 = por %p101, %p102
      %p104 = scmp.ne.s32.totalorder %s93, %s94
      %p105 = scmp.eq.s32.totalorder %s17, 0
      %p106 = por %p104, %p105
      %p107 = scmp.ne.s32.totalorder %s93, %s94
      %p108 = scmp.eq.s32.totalorder %s18, 1
      %p109 = por %p107, %p108
      %p111 = scmp.ne.s32.totalorder %s94, %s110
      %p112 = scmp.eq.s32.totalorder %s18, 0
      %p113 = por %p111, %p112
      %p114 = scmp.le.s32.totalorder 1, %s12
      %p115 = scmp.lt.s32.totalorder %s12, 3
      %p116 = pnand %p114, %p115
      %p117 = pneg %p116
      // Predicated region
      $region9: #{tpu_custom_call.1} parent=5 // pred_check
        _
      $region10: #{tpu_custom_call.1} parent=5 // pred_check_branch
        %119 = sbr.rel (%p116) target = $region12
      $region11: #{tpu_custom_call.1} parent=5 // pred_region
        %s120 = ssub.s32 %s12, 1
        // Predicated region
        $region13: #{tpu_custom_call.1} parent=11 // pred_check
          %p121 = pneg %p59
        $region14: #{tpu_custom_call.1} parent=11 // pred_check_branch
          %123 = sbr.rel (%p121) target = $region16
        $region15: #{tpu_custom_call.1} parent=11 // pred_region
          _
        $region16: #{tpu_custom_call.1} parent=11 // pred_fallthru
          _
        // Predicated region
        $region17: #{tpu_custom_call.1} parent=11 // pred_check
          %p124 = pneg %p80
        $region18: #{tpu_custom_call.1} parent=11 // pred_check_branch
          %126 = sbr.rel (%p124) target = $region20
        $region19: #{tpu_custom_call.1} parent=11 // pred_region
          _
        $region20: #{tpu_custom_call.1} parent=11 // pred_fallthru
          _
      $region12: #{tpu_custom_call.1} parent=5 // pred_fallthru
        _
      %p127 = scmp.lt.s32.totalorder %s12, 2
      // Predicated region
      $region21: #{tpu_custom_call.1} parent=5 // pred_check
        %p128 = pneg %p127
      $region22: #{tpu_custom_call.1} parent=5 // pred_check_branch
        %130 = sbr.rel (%p128) target = $region24
      $region23: #{tpu_custom_call.1} parent=5 // pred_region
        // Predicated region
        $region25: #{tpu_custom_call.1} parent=23 // pred_check
          %p131 = pneg %p32
        $region26: #{tpu_custom_call.1} parent=23 // pred_check_branch
          %133 = sbr.rel (%p131) target = $region28
        $region27: #{tpu_custom_call.1} parent=23 // pred_region
          %p134 = scmp.lt.s32.totalorder %s12, 1
          %s135 = scalar_select %p134, %s12, 1
          %s136 = smul.addr %s135, 2
          %s137 = smul.addr %s136, 4
          %s138 = scalar_lea.vmem %s0, %s137
        $region28: #{tpu_custom_call.1} parent=23 // pred_fallthru
          _
      $region24: #{tpu_custom_call.1} parent=5 // pred_fallthru
        _
      %p139 = scmp.le.s32.totalorder 1, %s12
      %p140 = scmp.lt.s32.totalorder %s12, 3
      %p141 = pnand %p139, %p140
      %p142 = pneg %p141
      // Predicated region
      $region29: #{tpu_custom_call.1} parent=5 // pred_check
        _
      $region30: #{tpu_custom_call.1} parent=5 // pred_check_branch
        %144 = sbr.rel (%p141) target = $region32
      $region31: #{tpu_custom_call.1} parent=5 // pred_region
        %s145 = ssub.s32 %s12, 1
        %p146 = scmp.lt.s32.totalorder %s17, 1
        %s147 = scalar_select %p146, %s17, 1
        %s148 = smul.addr %s147, 2
        %s149 = smul.addr %s148, 4
        %s150 = scalar_lea.vmem %s0, %s149
        %p151 = pneg %p38
        %p152 = pneg %p35
        %p153 = pneg %p59
        %p154 = pneg %p56
        %p155 = pneg %p80
        %p156 = pneg %p77
        %p157 = pneg %p106
        %p158 = pneg %p103
        %s159 = sand.u32 %s93, 1
        %s160 = scalar_lea.sflag [#allocation3], %s159
        %s161 = sand.u32 %s93, 1
        %s162 = smul.addr %s161, 32
        %s163 = scalar_lea.vmem [#allocation2], %s162
        %p164 = scmp.lt.s32.totalorder %s17, 1
        %s165 = scalar_select %p164, %s17, 1
        %s166 = smul.addr %s165, 2
        %s167 = smul.addr %s166, 4
        %s168 = scalar_lea.vmem %s0, %s167
        %v170 = vld [vmem:[%s1] sm:$0xf]
        %v171 = vld [vmem:[%s1 + $0x4] sm:$0xf]
        %v172 = vld [vmem:[%s168] sm:$0xff]
        %v173 = vld [vmem:[%s2] sm:$0xff]
        %v174 = vld [vmem:[%s2 + $0x8] sm:$0xff]
        %176 = vset.pattern.permute.xlu0 0
        %177 = vperm.xlu0 %176, %v173
        %v178 = vpop.permute.xlu0 %177
        %181 = vset.pattern.permute.xlu0 0
        %182 = vperm.xlu0 %181, %v174
        %v183 = vpop.permute.xlu0 %182
        %v187 = vunpack.c.l.b16 %v170
        %v188 = vunpack.c.l.b16 %v171
        %v189 = vpack.c.b16 %v188, %v187
        %v191 = vunpack.c.l.b16 %v172
        %v192 = vunpack.c.h.b16 %v172
        %v193 = vpack.c.b16 %v191, %v191
        %v194 = vpack.c.b16 %v192, %v192
        %vm195 = vcmask 64512
        %v197 = vsel %vm195, %v189, 0
        %vm199 = vcmask 1043456
        %v201 = vsel %vm199, %v193, 0
        %v204 = vsel %vm199, %v194, 0
        %206 = vmatpush.bf16.msra.mxu0 0
        %207 = vmatpush.bf16.msra.mxu0 0
        %208 = vmatpush.bf16.msra.mxu0 0
        %209 = vmatpush.bf16.msra.mxu0 0
        %210 = vmatpush.bf16.msra.mxu0 0
        %211 = vmatpush.bf16.msra.mxu0 0
        %212 = vmatpush.bf16.msra.mxu0 0
        %213 = vmatpush.bf16.msra.mxu0 %v201
        %214 = vmatmul.bf16.gmra.mxu0 %v197
        %v215 = vpop.f32.mrf.mxu0
        %v216 = vadd.f32 %v178, %v215
        %v217 = vpop.f32.mrf.mxu0
        %v218 = vadd.f32 %v183, %v217
        %219 = vdwg.mxu0
        %220 = vmatpush.bf16.msra.mxu0 0
        %221 = vmatpush.bf16.msra.mxu0 0
        %222 = vmatpush.bf16.msra.mxu0 0
        %223 = vmatpush.bf16.msra.mxu0 0
        %224 = vmatpush.bf16.msra.mxu0 0
        %225 = vmatpush.bf16.msra.mxu0 0
        %226 = vmatpush.bf16.msra.mxu0 0
        %227 = vmatpush.bf16.msra.mxu0 %v204
        %228 = vmatmul.bf16.gmra.mxu0 %v197
        %v229 = vpop.f32.mrf.mxu0
        %v230 = vadd.f32 %v178, %v229
        %v231 = vpop.f32.mrf.mxu0
        %v232 = vadd.f32 %v183, %v231
        %233 = vdwg.mxu0
        %234 = vst [vmem:[%s163] sm:$0xff] %v216
        %235 = vst [vmem:[%s163 + $0x8] sm:$0xff] %v230
        %236 = vst [vmem:[%s163 + $0x10] sm:$0xff] %v218
        %237 = vst [vmem:[%s163 + $0x18] sm:$0xff] %v232
        %s238 = sand.u32 %s93, 1
        %s239 = scalar_lea.sflag [#allocation3], %s238
        %s240 = sand.u32 %s93, 1
        %s241 = smul.addr %s240, 32
        %s242 = scalar_lea.vmem [#allocation2], %s241
        // Predicated region
        $region33: #{tpu_custom_call.1} parent=31 // pred_check
          %p243 = pneg %p103
        $region34: #{tpu_custom_call.1} parent=31 // pred_check_branch
          %245 = sbr.rel (%p243) target = $region36
        $region35: #{tpu_custom_call.1} parent=31 // pred_region
          %247 = vsyncadd %s239, 0
          %s248 = smul.addr %s17, 4
          %s249 = smul.addr %s248, 8
          %s250 = scalar_lea.hbm %s3, %s249
          %s251 = sshll.u32 %s242, 4
          %s252 = int_to_ptr.vmem [resolvable:$true] %s251
          %s253 = sshll.u32 %s250, 4
          %s254 = int_to_ptr.hbm [resolvable:$true] %s253
          %259 = dma.vmem_to_hbm [thread:$0]  %s252, 512, %s254, %s239, 256, 256, 16
        $region36: #{tpu_custom_call.1} parent=31 // pred_fallthru
          _
      $region32: #{tpu_custom_call.1} parent=5 // pred_fallthru
        _
      %p260 = scmp.le.s32.totalorder 2, %s12
      // Predicated region
      $region37: #{tpu_custom_call.1} parent=5 // pred_check
        %p261 = pneg %p260
      $region38: #{tpu_custom_call.1} parent=5 // pred_check_branch
        %263 = sbr.rel (%p261) target = $region40
      $region39: #{tpu_custom_call.1} parent=5 // pred_region
        %s264 = ssub.s32 %s12, 2
        // Predicated region
        $region41: #{tpu_custom_call.1} parent=39 // pred_check
          %p265 = pneg %p109
        $region42: #{tpu_custom_call.1} parent=39 // pred_check_branch
          %267 = sbr.rel (%p265) target = $region44
        $region43: #{tpu_custom_call.1} parent=39 // pred_region
          %s268 = sand.u32 %s94, 1
          %s269 = scalar_lea.sflag [#allocation3], %s268
          %s270 = sand.u32 %s94, 1
          %s271 = smul.addr %s270, 32
          %s272 = scalar_lea.vmem [#allocation2], %s271
          %274 = dma.done %s269, 512
        $region44: #{tpu_custom_call.1} parent=39 // pred_fallthru
          _
      $region40: #{tpu_custom_call.1} parent=5 // pred_fallthru
        _
    $region6: #{tpu_custom_call.1} parent=1 // loop_footer
      %s16 = sadd.s32 1, %s12
    $region7: #{tpu_custom_call.1} parent=1 // loop_footer_branch
      %11 = sbr.rel target = $region3
    $region8: #{tpu_custom_call.1} parent=1 // loop_exit
      _
    %275 = vsyncpa [#allocation3], 1
    %s276 = scalar_lea.sflag [#allocation3], 1
    %277 = vsyncpa %s276, 1

</llo_original>
